<compile_context>
chip_gen: v5e
topology: v5e:2x2
jax: 0.10.0
libtpu: 0.0.40
codegen_flags: <defaults>
</compile_context>

<pallas_src>
import functools

import jax
import jax.numpy as jnp
from jax import lax
from jax.experimental import pallas as pl
from jax.experimental.pallas import tpu as pltpu

EPS = 1e-5
LANES = 128
SUBLANES = 8


def _round_up(n, m):
    return (n + m - 1) // m * m


def _dot_nt(a, w):
    # a @ w.T without materializing a transpose: contract dim 1 of both.
    return lax.dot_general(a, w, (((1,), (1,)), ((), ())),
                           preferred_element_type=jnp.float32)


def _res_block_kernel(x_ref, w1_ref, w2_ref, vec_ref, o_ref,
                      s1_ref, q1_ref, s2_ref, q2_ref, *, batch, tile_b):
    phase = pl.program_id(0)   # 0: BN1 stats, 1: BN2 stats, 2: finalize
    bt = pl.program_id(1)      # batch tile

    @pl.when(jnp.logical_and(phase == 0, bt == 0))
    def _init():
        s1_ref[...] = jnp.zeros_like(s1_ref)
        q1_ref[...] = jnp.zeros_like(q1_ref)
        s2_ref[...] = jnp.zeros_like(s2_ref)
        q2_ref[...] = jnp.zeros_like(q2_ref)

    x = x_ref[...].astype(jnp.float32)
    vec = vec_ref[...]
    b1, g1, be1 = vec[0:1], vec[1:2], vec[2:3]
    b2, g2, be2 = vec[3:4], vec[4:5], vec[5:6]

    # Rows past the true batch size are padding: exclude them from BN stats.
    row_ids = bt * tile_b + lax.broadcasted_iota(jnp.int32, (tile_b, 1), 0)
    row_mask = (row_ids < batch).astype(jnp.float32)
    inv_b = 1.0 / batch

    # layer1: x @ W1^T + b1  (MXU, f32 accumulate, no transpose materialized)
    y1 = _dot_nt(x, w1_ref[...]) + b1

    @pl.when(phase == 0)
    def _accum_bn1():
        ym = y1 * row_mask
        s1_ref[...] += jnp.sum(ym, axis=0, keepdims=True)
        q1_ref[...] += jnp.sum(ym * y1, axis=0, keepdims=True)

    @pl.when(phase > 0)
    def _after_bn1_stats():
        mean1 = s1_ref[...] * inv_b
        var1 = q1_ref[...] * inv_b - mean1 * mean1            # biased var
        h = jnp.maximum((y1 - mean1) * lax.rsqrt(var1 + EPS) * g1 + be1, 0.0)

        # layer2: h @ W2^T + b2
        y2 = _dot_nt(h, w2_ref[...]) + b2

        @pl.when(phase == 1)
        def _accum_bn2():
            ym = y2 * row_mask
            s2_ref[...] += jnp.sum(ym, axis=0, keepdims=True)
            q2_ref[...] += jnp.sum(ym * y2, axis=0, keepdims=True)

        @pl.when(phase == 2)
        def _finalize():
            mean2 = s2_ref[...] * inv_b
            var2 = q2_ref[...] * inv_b - mean2 * mean2
            y2n = (y2 - mean2) * lax.rsqrt(var2 + EPS) * g2 + be2
            o_ref[...] = jnp.maximum(y2n + x, 0.0).astype(o_ref.dtype)


def pack_params(params):
    """One-time host-side prep: pad features to a lane multiple and stack the
    six per-feature vectors into a single (8, Fp) slab.  Do NOT call per-step."""
    w1, b1, g1, be1, w2, b2, g2, be2 = params
    F = w1.shape[0]
    Fp = _round_up(F, LANES)
    w1p = jnp.zeros((Fp, Fp), jnp.float32).at[:F, :F].set(w1)
    w2p = jnp.zeros((Fp, Fp), jnp.float32).at[:F, :F].set(w2)
    vec = jnp.zeros((8, Fp), jnp.float32)
    vec = vec.at[0, :F].set(b1).at[1, :F].set(g1).at[2, :F].set(be1)
    vec = vec.at[3, :F].set(b2).at[4, :F].set(g2).at[5, :F].set(be2)
    return {"w1": w1p, "w2": w2p, "vec": vec, "features": F}


def res_block_forward(x, packed, *, tile_b=256):
    w1p, w2p, vec = packed["w1"], packed["w2"], packed["vec"]
    F = packed["features"]
    Fp = w1p.shape[0]
    B = x.shape[0]
    assert x.shape[1] == F

    tile_b = int(min(tile_b, _round_up(B, SUBLANES)))     # multiple of 8
    Bp = _round_up(B, tile_b)
    n_bt = Bp // tile_b

    xp = x
    if (Bp, Fp) != (B, F):
        xp = jnp.zeros((Bp, Fp), x.dtype).at[:B, :F].set(x)

    # VMEM budget (double-buffered weights + x/out tiles + temporaries).
    # On v7x (64 MiB VMEM), shrink tile_b / cast weights to bf16 if this grows.
    est = (2 * 2 * Fp * Fp * 4
           + 2 * 2 * tile_b * Fp * 4
           + 2 * 8 * Fp * 4
           + 4 * Fp * 4
           + 8 * tile_b * Fp * 4)
    vmem_limit = int(min(max(32 * 2**20, est + (2 << 20)), 100 * 2**20))

    cost = pl.CostEstimate(
        flops=10 * Bp * Fp * Fp,                       # 5 MXU matmuls total
        transcendentals=4 * n_bt * Fp,                 # rsqrt
        bytes_accessed=(3 * Bp * Fp * 4                # x read per phase
                        + 2 * Fp * Fp * 4              # resident weights
                        + 3 * Bp * Fp * 4              # output writebacks
                        + 8 * Fp * 4),
    )

    kernel = functools.partial(_res_block_kernel, batch=B, tile_b=tile_b)

    out = pl.pallas_call(
        kernel,
        out_shape=jax.ShapeDtypeStruct((Bp, Fp), x.dtype),
        grid_spec=pltpu.PrefetchScalarGridSpec(
            num_scalar_prefetch=0,
            grid=(3, n_bt),
            in_specs=[
                pl.BlockSpec((tile_b, Fp), lambda p, bt: (bt, 0)),  # x tile
                pl.BlockSpec((Fp, Fp), lambda p, bt: (0, 0)),       # W1 (resident)
                pl.BlockSpec((Fp, Fp), lambda p, bt: (0, 0)),       # W2 (resident)
                pl.BlockSpec((8, Fp), lambda p, bt: (0, 0)),        # packed vectors
            ],
            out_specs=pl.BlockSpec((tile_b, Fp), lambda p, bt: (bt, 0)),
            scratch_shapes=[pltpu.VMEM((1, Fp), jnp.float32)] * 4,  # s1,q1,s2,q2
        ),
        compiler_params=pltpu.CompilerParams(
            # Batch axis accumulates BN stats into shared scratch -> must stay
            # "arbitrary" (marking it parallel would corrupt the statistics).
            dimension_semantics=("arbitrary", "arbitrary"),
            vmem_limit_bytes=vmem_limit,
        ),
        cost_estimate=cost,
    )(xp, w1p, w2p, vec)

    if (Bp, Fp) != (B, F):
        out = out[:B, :F]
    return out


def res_block_reference(x, params):
    w1, b1, g1, be1, w2, b2, g2, be2 = params

    def bn(y, g, b):
        m = jnp.mean(y, axis=0)
        v = jnp.mean((y - m) ** 2, axis=0)
        return (y - m) / jnp.sqrt(v + EPS) * g + b

    y = jnp.maximum(bn(x @ w1.T + b1, g1, be1), 0.0)
    y = bn(y @ w2.T + b2, g2, be2)
    return jnp.maximum(y + x, 0.0)


if __name__ == "__main__":
    B, F = 8, 32
    key = jax.random.PRNGKey(0)
    kx, k1, k2, k3, k4 = jax.random.split(key, 5)

    x = jax.random.normal(kx, (B, F), dtype=jnp.float32)

    bound = 1.0 / float(F) ** 0.5
    w1 = jax.random.uniform(k1, (F, F), minval=-bound, maxval=bound, dtype=jnp.float32)
    b1 = jax.random.uniform(k2, (F,), minval=-bound, maxval=bound, dtype=jnp.float32)
    w2 = jax.random.uniform(k3, (F, F), minval=-bound, maxval=bound, dtype=jnp.float32)
    b2 = jax.random.uniform(k4, (F,), minval=-bound, maxval=bound, dtype=jnp.float32)
    # BatchNorm1d default init: weight=1, bias=0 (training-mode batch stats).
    g1 = jnp.ones((F,), jnp.float32)
    be1 = jnp.zeros((F,), jnp.float32)
    g2 = jnp.ones((F,), jnp.float32)
    be2 = jnp.zeros((F,), jnp.float32)

    params = (w1, b1, g1, be1, w2, b2, g2, be2)

    packed = pack_params(params)          # one-time prep, outside the hot path
    out = res_block_forward(x, packed)
    out = jax.block_until_ready(out)

    ref = res_block_reference(x, params)
    assert out.shape == (B, F)
    assert jnp.allclose(out, ref, atol=1e-4, rtol=1e-4), "mismatch vs reference"

    print("KERNEL_OK")
</pallas_src>

<mosaic_0001>
module attributes {stable_mosaic.version = 11 : i64} {
  func.func @_res_block_kernel(%arg0: i32, %arg1: i32, %arg2: memref<8x128xf32, #tpu.memory_space<vmem>>, %arg3: memref<128x128xf32, #tpu.memory_space<vmem>>, %arg4: memref<128x128xf32, #tpu.memory_space<vmem>>, %arg5: memref<8x128xf32, #tpu.memory_space<vmem>>, %arg6: memref<8x128xf32, #tpu.memory_space<vmem>>, %arg7: memref<1x128xf32, #tpu.memory_space<vmem>>, %arg8: memref<1x128xf32, #tpu.memory_space<vmem>>, %arg9: memref<1x128xf32, #tpu.memory_space<vmem>>, %arg10: memref<1x128xf32, #tpu.memory_space<vmem>>) attributes {dimension_semantics = [#tpu.dimension_semantics<arbitrary>, #tpu.dimension_semantics<arbitrary>], iteration_bounds = array<i64: 3, 1>, scalar_prefetch = 0 : i64, scratch_operands = 4 : i64, tpu.core_type = #tpu.core_type<tc>, window_params = [{transform_indices = @transform_0, window_bounds = array<i64: 8, 128>}, {pipeline_mode = #tpu.pipeline_mode<synchronous>, transform_indices = @transform_1, window_bounds = array<i64: 128, 128>}, {pipeline_mode = #tpu.pipeline_mode<synchronous>, transform_indices = @transform_2, window_bounds = array<i64: 128, 128>}, {pipeline_mode = #tpu.pipeline_mode<synchronous>, transform_indices = @transform_3, window_bounds = array<i64: 8, 128>}, {transform_indices = @transform_4, window_bounds = array<i64: 8, 128>}]} {
    %c0_i32 = arith.constant 0 : i32
    %0 = arith.cmpi eq, %arg0, %c0_i32 : i32
    %c0_i32_0 = arith.constant 0 : i32
    %1 = arith.cmpi eq, %arg1, %c0_i32_0 : i32
    %2 = arith.andi %0, %1 : i1
    %3 = arith.extui %2 : i1 to i32
    %c0_i32_1 = arith.constant 0 : i32
    %4 = arith.cmpi ne, %3, %c0_i32_1 : i32
    scf.if %4 {
      %cst_12 = arith.constant 0.000000e+00 : f32
      %31 = vector.broadcast %cst_12 : f32 to vector<1x128xf32>
      %c0_13 = arith.constant 0 : index
      %c0_14 = arith.constant 0 : index
      %32 = vector.load %arg7[%c0_13, %c0_14] : memref<1x128xf32, #tpu.memory_space<vmem>>, vector<1x128xf32>
      tpu.vector_store %arg7[%c0_13, %c0_14], %31 {strides = array<i32>} : memref<1x128xf32, #tpu.memory_space<vmem>>, vector<1x128xf32>,
      %cst_15 = arith.constant 0.000000e+00 : f32
      %33 = vector.broadcast %cst_15 : f32 to vector<1x128xf32>
      %c0_16 = arith.constant 0 : index
      %c0_17 = arith.constant 0 : index
      %34 = vector.load %arg8[%c0_16, %c0_17] : memref<1x128xf32, #tpu.memory_space<vmem>>, vector<1x128xf32>
      tpu.vector_store %arg8[%c0_16, %c0_17], %33 {strides = array<i32>} : memref<1x128xf32, #tpu.memory_space<vmem>>, vector<1x128xf32>,
      %cst_18 = arith.constant 0.000000e+00 : f32
      %35 = vector.broadcast %cst_18 : f32 to vector<1x128xf32>
      %c0_19 = arith.constant 0 : index
      %c0_20 = arith.constant 0 : index
      %36 = vector.load %arg9[%c0_19, %c0_20] : memref<1x128xf32, #tpu.memory_space<vmem>>, vector<1x128xf32>
      tpu.vector_store %arg9[%c0_19, %c0_20], %35 {strides = array<i32>} : memref<1x128xf32, #tpu.memory_space<vmem>>, vector<1x128xf32>,
      %cst_21 = arith.constant 0.000000e+00 : f32
      %37 = vector.broadcast %cst_21 : f32 to vector<1x128xf32>
      %c0_22 = arith.constant 0 : index
      %c0_23 = arith.constant 0 : index
      %38 = vector.load %arg10[%c0_22, %c0_23] : memref<1x128xf32, #tpu.memory_space<vmem>>, vector<1x128xf32>
      tpu.vector_store %arg10[%c0_22, %c0_23], %37 {strides = array<i32>} : memref<1x128xf32, #tpu.memory_space<vmem>>, vector<1x128xf32>,
    } else {
    }
    %c0 = arith.constant 0 : index
    %c0_2 = arith.constant 0 : index
    %5 = vector.load %arg2[%c0, %c0_2] : memref<8x128xf32, #tpu.memory_space<vmem>>, vector<8x128xf32>
    %c0_3 = arith.constant 0 : index
    %c0_4 = arith.constant 0 : index
    %6 = vector.load %arg5[%c0_3, %c0_4] : memref<8x128xf32, #tpu.memory_space<vmem>>, vector<8x128xf32>
    %7 = vector.extract_strided_slice %6 {offsets = [0, 0], sizes = [1, 128], strides = [1, 1]} : vector<8x128xf32> to vector<1x128xf32>
    %8 = vector.extract_strided_slice %6 {offsets = [1, 0], sizes = [1, 128], strides = [1, 1]} : vector<8x128xf32> to vector<1x128xf32>
    %9 = vector.extract_strided_slice %6 {offsets = [2, 0], sizes = [1, 128], strides = [1, 1]} : vector<8x128xf32> to vector<1x128xf32>
    %10 = vector.extract_strided_slice %6 {offsets = [3, 0], sizes = [1, 128], strides = [1, 1]} : vector<8x128xf32> to vector<1x128xf32>
    %11 = vector.extract_strided_slice %6 {offsets = [4, 0], sizes = [1, 128], strides = [1, 1]} : vector<8x128xf32> to vector<1x128xf32>
    %12 = vector.extract_strided_slice %6 {offsets = [5, 0], sizes = [1, 128], strides = [1, 1]} : vector<8x128xf32> to vector<1x128xf32>
    %c8_i32 = arith.constant 8 : i32
    %13 = arith.muli %arg1, %c8_i32 : i32
    %14 = tpu.iota {dimensions = array<i32: 0>} : vector<8x1xi32>
    %15 = vector.broadcast %13 : i32 to vector<8x1xi32>
    %16 = arith.addi %15, %14 : vector<8x1xi32>
    %c8_i32_5 = arith.constant 8 : i32
    %17 = vector.broadcast %c8_i32_5 : i32 to vector<8x1xi32>
    %18 = arith.cmpi slt, %16, %17 : vector<8x1xi32>
    %19 = arith.extui %18 : vector<8x1xi1> to vector<8x1xi32>
    %20 = arith.sitofp %19 : vector<8x1xi32> to vector<8x1xf32>
    %c0_6 = arith.constant 0 : index
    %c0_7 = arith.constant 0 : index
    %21 = vector.load %arg3[%c0_6, %c0_7] : memref<128x128xf32, #tpu.memory_space<vmem>>, vector<128x128xf32>
    %cst = arith.constant dense<0.000000e+00> : vector<8x128xf32>
    %22 = tpu.matmul %5, %21, %cst {dimension_numbers = #tpu.dot_dimension_numbers<[1], [1], [0], [0], [0, 0, 1, 0], [], []>} : vector<8x128xf32>, vector<128x128xf32>, vector<8x128xf32> -> vector<8x128xf32>
    %23 = vector.broadcast %7 : vector<1x128xf32> to vector<8x128xf32>
    %24 = arith.addf %22, %23 : vector<8x128xf32>
    %c0_i32_8 = arith.constant 0 : i32
    %25 = arith.cmpi eq, %arg0, %c0_i32_8 : i32
    %26 = arith.extui %25 : i1 to i32
    %c0_i32_9 = arith.constant 0 : i32
    %27 = arith.cmpi ne, %26, %c0_i32_9 : i32
    scf.if %27 {
      %31 = vector.broadcast %20 : vector<8x1xf32> to vector<8x128xf32>
      %32 = arith.mulf %24, %31 : vector<8x128xf32>
      %c0_12 = arith.constant 0 : index
      %c0_13 = arith.constant 0 : index
      %33 = vector.load %arg7[%c0_12, %c0_13] : memref<1x128xf32, #tpu.memory_space<vmem>>, vector<1x128xf32>
      %cst_14 = arith.constant dense<0.000000e+00> : vector<128xf32>
      %34 = vector.multi_reduction <add>, %32, %cst_14 [0] : vector<8x128xf32> to vector<128xf32>
      %35 = vector.shape_cast %34 : vector<128xf32> to vector<1x128xf32>
      %36 = arith.addf %33, %35 : vector<1x128xf32>
      %c0_15 = arith.constant 0 : index
      %c0_16 = arith.constant 0 : index
      %37 = vector.load %arg7[%c0_15, %c0_16] : memref<1x128xf32, #tpu.memory_space<vmem>>, vector<1x128xf32>
      tpu.vector_store %arg7[%c0_15, %c0_16], %36 {strides = array<i32>} : memref<1x128xf32, #tpu.memory_space<vmem>>, vector<1x128xf32>,
      %c0_17 = arith.constant 0 : index
      %c0_18 = arith.constant 0 : index
      %38 = vector.load %arg8[%c0_17, %c0_18] : memref<1x128xf32, #tpu.memory_space<vmem>>, vector<1x128xf32>
      %39 = arith.mulf %32, %24 : vector<8x128xf32>
      %cst_19 = arith.constant dense<0.000000e+00> : vector<128xf32>
      %40 = vector.multi_reduction <add>, %39, %cst_19 [0] : vector<8x128xf32> to vector<128xf32>
      %41 = vector.shape_cast %40 : vector<128xf32> to vector<1x128xf32>
      %42 = arith.addf %38, %41 : vector<1x128xf32>
      %c0_20 = arith.constant 0 : index
      %c0_21 = arith.constant 0 : index
      %43 = vector.load %arg8[%c0_20, %c0_21] : memref<1x128xf32, #tpu.memory_space<vmem>>, vector<1x128xf32>
      tpu.vector_store %arg8[%c0_20, %c0_21], %42 {strides = array<i32>} : memref<1x128xf32, #tpu.memory_space<vmem>>, vector<1x128xf32>,
    } else {
    }
    %c0_i32_10 = arith.constant 0 : i32
    %28 = arith.cmpi sgt, %arg0, %c0_i32_10 : i32
    %29 = arith.extui %28 : i1 to i32
    %c0_i32_11 = arith.constant 0 : i32
    %30 = arith.cmpi ne, %29, %c0_i32_11 : i32
    scf.if %30 {
      %c0_12 = arith.constant 0 : index
      %c0_13 = arith.constant 0 : index
      %31 = vector.load %arg7[%c0_12, %c0_13] : memref<1x128xf32, #tpu.memory_space<vmem>>, vector<1x128xf32>
      %cst_14 = arith.constant 1.250000e-01 : f32
      %32 = vector.broadcast %cst_14 : f32 to vector<1x128xf32>
      %33 = arith.mulf %31, %32 : vector<1x128xf32>
      %c0_15 = arith.constant 0 : index
      %c0_16 = arith.constant 0 : index
      %34 = vector.load %arg8[%c0_15, %c0_16] : memref<1x128xf32, #tpu.memory_space<vmem>>, vector<1x128xf32>
      %cst_17 = arith.constant 1.250000e-01 : f32
      %35 = vector.broadcast %cst_17 : f32 to vector<1x128xf32>
      %36 = arith.mulf %34, %35 : vector<1x128xf32>
      %37 = arith.mulf %33, %33 : vector<1x128xf32>
      %38 = arith.subf %36, %37 : vector<1x128xf32>
      %39 = vector.broadcast %33 : vector<1x128xf32> to vector<8x128xf32>
      %40 = arith.subf %24, %39 : vector<8x128xf32>
      %cst_18 = arith.constant 9.99999974E-6 : f32
      %41 = vector.broadcast %cst_18 : f32 to vector<1x128xf32>
      %42 = arith.addf %38, %41 : vector<1x128xf32>
      %43 = math.rsqrt %42 : vector<1x128xf32>
      %44 = vector.broadcast %43 : vector<1x128xf32> to vector<8x128xf32>
      %45 = arith.mulf %40, %44 : vector<8x128xf32>
      %46 = vector.broadcast %8 : vector<1x128xf32> to vector<8x128xf32>
      %47 = arith.mulf %45, %46 : vector<8x128xf32>
      %48 = vector.broadcast %9 : vector<1x128xf32> to vector<8x128xf32>
      %49 = arith.addf %47, %48 : vector<8x128xf32>
      %cst_19 = arith.constant 0.000000e+00 : f32
      %50 = vector.broadcast %cst_19 : f32 to vector<8x128xf32>
      %51 = arith.maximumf %49, %50 : vector<8x128xf32>
      %c0_20 = arith.constant 0 : index
      %c0_21 = arith.constant 0 : index
      %52 = vector.load %arg4[%c0_20, %c0_21] : memref<128x128xf32, #tpu.memory_space<vmem>>, vector<128x128xf32>
      %cst_22 = arith.constant dense<0.000000e+00> : vector<8x128xf32>
      %53 = tpu.matmul %51, %52, %cst_22 {dimension_numbers = #tpu.dot_dimension_numbers<[1], [1], [0], [0], [0, 0, 1, 0], [], []>} : vector<8x128xf32>, vector<128x128xf32>, vector<8x128xf32> -> vector<8x128xf32>
      %54 = vector.broadcast %10 : vector<1x128xf32> to vector<8x128xf32>
      %55 = arith.addf %53, %54 : vector<8x128xf32>
      %c1_i32 = arith.constant 1 : i32
      %56 = arith.cmpi eq, %arg0, %c1_i32 : i32
      %57 = arith.extui %56 : i1 to i32
      %c0_i32_23 = arith.constant 0 : i32
      %58 = arith.cmpi ne, %57, %c0_i32_23 : i32
      scf.if %58 {
        %62 = vector.broadcast %20 : vector<8x1xf32> to vector<8x128xf32>
        %63 = arith.mulf %55, %62 : vector<8x128xf32>
        %c0_25 = arith.constant 0 : index
        %c0_26 = arith.constant 0 : index
        %64 = vector.load %arg9[%c0_25, %c0_26] : memref<1x128xf32, #tpu.memory_space<vmem>>, vector<1x128xf32>
        %cst_27 = arith.constant dense<0.000000e+00> : vector<128xf32>
        %65 = vector.multi_reduction <add>, %63, %cst_27 [0] : vector<8x128xf32> to vector<128xf32>
        %66 = vector.shape_cast %65 : vector<128xf32> to vector<1x128xf32>
        %67 = arith.addf %64, %66 : vector<1x128xf32>
        %c0_28 = arith.constant 0 : index
        %c0_29 = arith.constant 0 : index
        %68 = vector.load %arg9[%c0_28, %c0_29] : memref<1x128xf32, #tpu.memory_space<vmem>>, vector<1x128xf32>
        tpu.vector_store %arg9[%c0_28, %c0_29], %67 {strides = array<i32>} : memref<1x128xf32, #tpu.memory_space<vmem>>, vector<1x128xf32>,
        %c0_30 = arith.constant 0 : index
        %c0_31 = arith.constant 0 : index
        %69 = vector.load %arg10[%c0_30, %c0_31] : memref<1x128xf32, #tpu.memory_space<vmem>>, vector<1x128xf32>
        %70 = arith.mulf %63, %55 : vector<8x128xf32>
        %cst_32 = arith.constant dense<0.000000e+00> : vector<128xf32>
        %71 = vector.multi_reduction <add>, %70, %cst_32 [0] : vector<8x128xf32> to vector<128xf32>
        %72 = vector.shape_cast %71 : vector<128xf32> to vector<1x128xf32>
        %73 = arith.addf %69, %72 : vector<1x128xf32>
        %c0_33 = arith.constant 0 : index
        %c0_34 = arith.constant 0 : index
        %74 = vector.load %arg10[%c0_33, %c0_34] : memref<1x128xf32, #tpu.memory_space<vmem>>, vector<1x128xf32>
        tpu.vector_store %arg10[%c0_33, %c0_34], %73 {strides = array<i32>} : memref<1x128xf32, #tpu.memory_space<vmem>>, vector<1x128xf32>,
      } else {
      }
      %c2_i32 = arith.constant 2 : i32
      %59 = arith.cmpi eq, %arg0, %c2_i32 : i32
      %60 = arith.extui %59 : i1 to i32
      %c0_i32_24 = arith.constant 0 : i32
      %61 = arith.cmpi ne, %60, %c0_i32_24 : i32
      scf.if %61 {
        %c0_25 = arith.constant 0 : index
        %c0_26 = arith.constant 0 : index
        %62 = vector.load %arg9[%c0_25, %c0_26] : memref<1x128xf32, #tpu.memory_space<vmem>>, vector<1x128xf32>
        %cst_27 = arith.constant 1.250000e-01 : f32
        %63 = vector.broadcast %cst_27 : f32 to vector<1x128xf32>
        %64 = arith.mulf %62, %63 : vector<1x128xf32>
        %c0_28 = arith.constant 0 : index
        %c0_29 = arith.constant 0 : index
        %65 = vector.load %arg10[%c0_28, %c0_29] : memref<1x128xf32, #tpu.memory_space<vmem>>, vector<1x128xf32>
        %cst_30 = arith.constant 1.250000e-01 : f32
        %66 = vector.broadcast %cst_30 : f32 to vector<1x128xf32>
        %67 = arith.mulf %65, %66 : vector<1x128xf32>
        %68 = arith.mulf %64, %64 : vector<1x128xf32>
        %69 = arith.subf %67, %68 : vector<1x128xf32>
        %70 = vector.broadcast %64 : vector<1x128xf32> to vector<8x128xf32>
        %71 = arith.subf %55, %70 : vector<8x128xf32>
        %cst_31 = arith.constant 9.99999974E-6 : f32
        %72 = vector.broadcast %cst_31 : f32 to vector<1x128xf32>
        %73 = arith.addf %69, %72 : vector<1x128xf32>
        %74 = math.rsqrt %73 : vector<1x128xf32>
        %75 = vector.broadcast %74 : vector<1x128xf32> to vector<8x128xf32>
        %76 = arith.mulf %71, %75 : vector<8x128xf32>
        %77 = vector.broadcast %11 : vector<1x128xf32> to vector<8x128xf32>
        %78 = arith.mulf %76, %77 : vector<8x128xf32>
        %79 = vector.broadcast %12 : vector<1x128xf32> to vector<8x128xf32>
        %80 = arith.addf %78, %79 : vector<8x128xf32>
        %81 = arith.addf %80, %5 : vector<8x128xf32>
        %cst_32 = arith.constant 0.000000e+00 : f32
        %82 = vector.broadcast %cst_32 : f32 to vector<8x128xf32>
        %83 = arith.maximumf %81, %82 : vector<8x128xf32>
        %c0_33 = arith.constant 0 : index
        %c0_34 = arith.constant 0 : index
        %84 = vector.load %arg6[%c0_33, %c0_34] : memref<8x128xf32, #tpu.memory_space<vmem>>, vector<8x128xf32>
        tpu.vector_store %arg6[%c0_33, %c0_34], %83 {strides = array<i32>} : memref<8x128xf32, #tpu.memory_space<vmem>>, vector<8x128xf32>,
      } else {
      }
    } else {
    }
    return
  }
  func.func @transform_0(%arg0: i32, %arg1: i32) -> (i32, i32) {
    %c0_i32 = arith.constant 0 : i32
    %c0_i32_0 = arith.constant 0 : i32
    return %arg1, %c0_i32 : i32, i32
  }
  func.func @transform_1(%arg0: i32, %arg1: i32) -> (i32, i32) {
    %c0_i32 = arith.constant 0 : i32
    %c0_i32_0 = arith.constant 0 : i32
    %c0_i32_1 = arith.constant 0 : i32
    return %c0_i32, %c0_i32_0 : i32, i32
  }
  func.func @transform_2(%arg0: i32, %arg1: i32) -> (i32, i32) {
    %c0_i32 = arith.constant 0 : i32
    %c0_i32_0 = arith.constant 0 : i32
    %c0_i32_1 = arith.constant 0 : i32
    return %c0_i32, %c0_i32_0 : i32, i32
  }
  func.func @transform_3(%arg0: i32, %arg1: i32) -> (i32, i32) {
    %c0_i32 = arith.constant 0 : i32
    %c0_i32_0 = arith.constant 0 : i32
    %c0_i32_1 = arith.constant 0 : i32
    return %c0_i32, %c0_i32_0 : i32, i32
  }
  func.func @transform_4(%arg0: i32, %arg1: i32) -> (i32, i32) {
    %c0_i32 = arith.constant 0 : i32
    %c0_i32_0 = arith.constant 0 : i32
    return %arg1, %c0_i32 : i32, i32
  }
}

</mosaic_0001>

<llo_original>
// kernel: tpu_custom_call.1
$region0: #{tpu_custom_call.1}
  #allocation0 [shape = 'u32[]', space=smem, size = 0x4, offset = 0x4, fixed_abs, tag = 'smem constant byte address 0x4 - core index']
  #allocation1 [shape = 'u32[72,128]{1,0:T(1,128)}', space=vmem, size = 0x9000, scoped, tag = 'internal scratch']
  #allocation2 [shape = 'f32[1,128]{1,0:T(1,128)}', space=vmem, size = 0x200, scoped, tag = 'scratch operand']
  #allocation3 [shape = 'f32[1,128]{1,0:T(1,128)}', space=vmem, size = 0x200, scoped, tag = 'scratch operand']
  #allocation4 [shape = 'f32[1,128]{1,0:T(1,128)}', space=vmem, size = 0x200, scoped, tag = 'scratch operand']
  #allocation5 [shape = 'f32[1,128]{1,0:T(1,128)}', space=vmem, size = 0x200, scoped, tag = 'scratch operand']
  %s0 = inlined_call_operand.hbm [shape: f32[8,128], index: 0, kind: input, shape index: {}]
  %s1 = inlined_call_operand.hbm [shape: f32[128,128], index: 1, kind: input, shape index: {}]
  %s2 = inlined_call_operand.hbm [shape: f32[128,128], index: 2, kind: input, shape index: {}]
  %s3 = inlined_call_operand.hbm [shape: f32[8,128], index: 3, kind: input, shape index: {}]
  %s4 = inlined_call_operand.hbm [shape: f32[8,128], index: 4, kind: output, shape index: {}]
  %s5 = sld [smem:[#allocation0]]
  $region85: #{tpu_custom_call.1} parent=0
    _
  %s7 = ssub.s32 1, %s5
  %s8 = scalar_select 0, %s7, %s5
  $region1: #{tpu_custom_call.1} parent=0
    #allocation6 [shape = 'u8[4096]{0}', space=vmem, size = 0x1000, scoped, tag = 'input window, operand 0, single buffered']
    #allocation7 [shape = 's32[2]{0}', space=sflag, size = 0x8, scoped, tag = 'scoped memory for tpu_custom_call.1']
    #allocation8 [shape = 's32[2]{0}', space=sflag, size = 0x8, scoped, tag = 'scoped memory for tpu_custom_call.1']
    #allocation9 [shape = 'u8[65536]{0}', space=vmem, size = 0x10000, scoped, tag = 'input window, operand 1, single buffered']
    #allocation10 [shape = 's32[1]{0}', space=sflag, size = 0x4, scoped, tag = 'scoped memory for tpu_custom_call.1']
    #allocation11 [shape = 'u8[65536]{0}', space=vmem, size = 0x10000, scoped, tag = 'input window, operand 2, single buffered']
    #allocation12 [shape = 'u8[4096]{0}', space=vmem, size = 0x1000, scoped, tag = 'input window, operand 3, single buffered']
    #allocation13 [shape = 's32[1]{0}', space=sflag, size = 0x4, scoped, tag = 'scoped memory for tpu_custom_call.1']
    #allocation14 [shape = 'u8[4096]{0}', space=vmem, size = 0x1000, scoped, tag = 'output window, operand 0, single buffered']
    %9 = vsyncpa [#allocation7], 0
    %10 = vsyncpa [#allocation10], 0
    %11 = vsyncpa [#allocation13], 0
    %12 = vsyncpa [#allocation8], 0
    loop: start=0, step=1, limit=5
    $region2: #{tpu_custom_call.1} parent=1 // loop_pre_header
      _
    $region3: #{tpu_custom_call.1} parent=1 // loop_header
      %s14 = sphi 0, %s18
      %p15 = scmp.ge.s32.totalorder %s14, 5
      %s21 = sphi 0, %s33
      %s22 = sphi 0, %s29
      %s23 = sphi 0, %s21
      %s24 = sphi 0, %s22
      %s25 = sphi 0, %s23
      %s26 = sphi 0, %s24
      %s36 = sphi 0, %s38
      %s39 = sphi 0, %s36
      %s40 = sphi 0, %s39
      %s56 = sphi 0, %s40
      %s60 = sphi 0, %s60
      %s62 = sphi 0, %s60
      %s63 = sphi 0, %s62
      %s77 = sphi 0, %s63
      %s81 = sphi 0, %s81
      %s83 = sphi 0, %s81
      %s84 = sphi 0, %s83
      %s98 = sphi 0, %s84
      %s102 = sphi 0, %s102
      %s104 = sphi 0, %s102
      %s105 = sphi 0, %s104
      %s119 = sphi 0, %s105
      %s125 = sphi 0, %s127
      %s128 = sphi 0, %s125
      %s129 = sphi 0, %s128
      %s145 = sphi 0, %s129
    $region4: #{tpu_custom_call.1} parent=1 // loop_header_branch
      %17 = sbr.rel (%p15) target = $region8
    $region5: #{tpu_custom_call.1} parent=1 // loop_body
      %s19 = ssub.s32 %s14, 1
      %s20 = ssub.s32 %s14, 2
      %s27 = sadd.s32 1, %s22
      %p28 = scmp.ge.s32.totalorder %s27, 1
      %s29 = scalar_select %p28, 0, %s27
      %s30 = sadd.s32 1, %s21
      %s31 = scalar_select %p28, %s30, %s21
      %p32 = scmp.ge.s32.totalorder %s31, 3
      %s33 = scalar_select %p32, 0, %s31
      %s34 = ssub.s32 %s22, %s29
      %p35 = scmp.eq.s32.totalorder %s34, 0
      %s37 = sadd.s32 %s36, 1
      %s38 = scalar_select %p35, %s36, %s37
      %p41 = pneg %p35
      %p42 = scmp.eq.s32.totalorder %s14, 2
      %p43 = por %p41, %p42
      %p44 = scmp.ne.s32.totalorder %s36, %s39
      %p45 = scmp.eq.s32.totalorder %s14, 0
      %p46 = por %p44, %p45
      %p47 = scmp.ne.s32.totalorder %s36, %s39
      %p48 = scmp.eq.s32.totalorder %s19, 2
      %p49 = por %p47, %p48
      %p50 = scmp.ne.s32.totalorder %s39, %s40
      %p51 = scmp.eq.s32.totalorder %s19, 0
      %p52 = por %p50, %p51
      %p53 = scmp.ne.s32.totalorder %s39, %s40
      %p54 = scmp.eq.s32.totalorder %s20, 2
      %p55 = por %p53, %p54
      %p57 = scmp.ne.s32.totalorder %s40, %s56
      %p58 = scmp.eq.s32.totalorder %s20, 0
      %p59 = por %p57, %p58
      %s61 = sadd.s32 %s60, 1
      %p64 = scmp.eq.s32.totalorder %s14, 2
      %p65 = scmp.ne.s32.totalorder %s60, %s62
      %p66 = scmp.eq.s32.totalorder %s14, 0
      %p67 = por %p65, %p66
      %p68 = scmp.ne.s32.totalorder %s60, %s62
      %p69 = scmp.eq.s32.totalorder %s19, 2
      %p70 = por %p68, %p69
      %p71 = scmp.ne.s32.totalorder %s62, %s63
      %p72 = scmp.eq.s32.totalorder %s19, 0
      %p73 = por %p71, %p72
      %p74 = scmp.ne.s32.totalorder %s62, %s63
      %p75 = scmp.eq.s32.totalorder %s20, 2
      %p76 = por %p74, %p75
      %p78 = scmp.ne.s32.totalorder %s63, %s77
      %p79 = scmp.eq.s32.totalorder %s20, 0
      %p80 = por %p78, %p79
      %s82 = sadd.s32 %s81, 1
      %p85 = scmp.eq.s32.totalorder %s14, 2
      %p86 = scmp.ne.s32.totalorder %s81, %s83
      %p87 = scmp.eq.s32.totalorder %s14, 0
      %p88 = por %p86, %p87
      %p89 = scmp.ne.s32.totalorder %s81, %s83
      %p90 = scmp.eq.s32.totalorder %s19, 2
      %p91 = por %p89, %p90
      %p92 = scmp.ne.s32.totalorder %s83, %s84
      %p93 = scmp.eq.s32.totalorder %s19, 0
      %p94 = por %p92, %p93
      %p95 = scmp.ne.s32.totalorder %s83, %s84
      %p96 = scmp.eq.s32.totalorder %s20, 2
      %p97 = por %p95, %p96
      %p99 = scmp.ne.s32.totalorder %s84, %s98
      %p100 = scmp.eq.s32.totalorder %s20, 0
      %p101 = por %p99, %p100
      %s103 = sadd.s32 %s102, 1
      %p106 = scmp.eq.s32.totalorder %s14, 2
      %p107 = scmp.ne.s32.totalorder %s102, %s104
      %p108 = scmp.eq.s32.totalorder %s14, 0
      %p109 = por %p107, %p108
      %p110 = scmp.ne.s32.totalorder %s102, %s104
      %p111 = scmp.eq.s32.totalorder %s19, 2
      %p112 = por %p110, %p111
      %p113 = scmp.ne.s32.totalorder %s104, %s105
      %p114 = scmp.eq.s32.totalorder %s19, 0
      %p115 = por %p113, %p114
      %p116 = scmp.ne.s32.totalorder %s104, %s105
      %p117 = scmp.eq.s32.totalorder %s20, 2
      %p118 = por %p116, %p117
      %p120 = scmp.ne.s32.totalorder %s105, %s119
      %p121 = scmp.eq.s32.totalorder %s20, 0
      %p122 = por %p120, %p121
      %s123 = ssub.s32 %s22, %s29
      %p124 = scmp.eq.s32.totalorder %s123, 0
      %s126 = sadd.s32 %s125, 1
      %s127 = scalar_select %p124, %s125, %s126
      %p130 = pneg %p124
      %p131 = scmp.eq.s32.totalorder %s14, 2
      %p132 = por %p130, %p131
      %p133 = scmp.ne.s32.totalorder %s125, %s128
      %p134 = scmp.eq.s32.totalorder %s14, 0
      %p135 = por %p133, %p134
      %p136 = scmp.ne.s32.totalorder %s125, %s128
      %p137 = scmp.eq.s32.totalorder %s19, 2
      %p138 = por %p136, %p137
      %p139 = scmp.ne.s32.totalorder %s128, %s129
      %p140 = scmp.eq.s32.totalorder %s19, 0
      %p141 = por %p139, %p140
      %p142 = scmp.ne.s32.totalorder %s128, %s129
      %p143 = scmp.eq.s32.totalorder %s20, 2
      %p144 = por %p142, %p143
      %p146 = scmp.ne.s32.totalorder %s129, %s145
      %p147 = scmp.eq.s32.totalorder %s20, 0
      %p148 = por %p146, %p147
      %p149 = scmp.le.s32.totalorder 1, %s14
      %p150 = scmp.lt.s32.totalorder %s14, 4
      %p151 = pnand %p149, %p150
      %p152 = pneg %p151
      // Predicated region
      $region9: #{tpu_custom_call.1} parent=5 // pred_check
        _
      $region10: #{tpu_custom_call.1} parent=5 // pred_check_branch
        %154 = sbr.rel (%p151) target = $region12
      $region11: #{tpu_custom_call.1} parent=5 // pred_region
        %s155 = ssub.s32 %s14, 1
        // Predicated region
        $region13: #{tpu_custom_call.1} parent=11 // pred_check
          %p156 = pneg %p52
        $region14: #{tpu_custom_call.1} parent=11 // pred_check_branch
          %158 = sbr.rel (%p156) target = $region16
        $region15: #{tpu_custom_call.1} parent=11 // pred_region
          %160 = vsyncadd [#allocation7], 0
          %s161 = smul.addr %s24, 8
          %s162 = scalar_lea.hbm %s0, %s161
          %s164 = sshll.u32 %s162, 4
          %s165 = int_to_ptr.hbm [resolvable:$true] %s164
          %s166 = sshll.u32 [#allocation6], 4
          %s167 = int_to_ptr.vmem [resolvable:$true] %s166
          %169 = dma.hbm_to_vmem [thread:$0]  %s165, 128, %s167, [#allocation7]
        $region16: #{tpu_custom_call.1} parent=11 // pred_fallthru
          _
        // Predicated region
        $region17: #{tpu_custom_call.1} parent=11 // pred_check
          %p170 = pneg %p73
        $region18: #{tpu_custom_call.1} parent=11 // pred_check_branch
          %172 = sbr.rel (%p170) target = $region20
        $region19: #{tpu_custom_call.1} parent=11 // pred_region
          %174 = vsyncadd [#allocation10], 0
          %s175 = sshll.u32 %s1, 4
          %s176 = int_to_ptr.hbm [resolvable:$true] %s175
          %s177 = sshll.u32 [#allocation9], 4
          %s178 = int_to_ptr.vmem [resolvable:$true] %s177
          %183 = dma.hbm_to_vmem [thread:$0]  %s176, 2048, %s178, [#allocation10], 128, 128, 8
        $region20: #{tpu_custom_call.1} parent=11 // pred_fallthru
          _
        // Predicated region
        $region21: #{tpu_custom_call.1} parent=11 // pred_check
          %p184 = pneg %p94
        $region22: #{tpu_custom_call.1} parent=11 // pred_check_branch
          %186 = sbr.rel (%p184) target = $region24
        $region23: #{tpu_custom_call.1} parent=11 // pred_region
          %188 = vsyncadd [#allocation10], 0
          %s189 = sshll.u32 %s2, 4
          %s190 = int_to_ptr.hbm [resolvable:$true] %s189
          %s191 = sshll.u32 [#allocation11], 4
          %s192 = int_to_ptr.vmem [resolvable:$true] %s191
          %197 = dma.hbm_to_vmem [thread:$0]  %s190, 2048, %s192, [#allocation10], 128, 128, 8
        $region24: #{tpu_custom_call.1} parent=11 // pred_fallthru
          _
        // Predicated region
        $region25: #{tpu_custom_call.1} parent=11 // pred_check
          %p198 = pneg %p115
        $region26: #{tpu_custom_call.1} parent=11 // pred_check_branch
          %200 = sbr.rel (%p198) target = $region28
        $region27: #{tpu_custom_call.1} parent=11 // pred_region
          %202 = vsyncadd [#allocation13], 0
          %s204 = sshll.u32 %s3, 4
          %s205 = int_to_ptr.hbm [resolvable:$true] %s204
          %s206 = sshll.u32 [#allocation12], 4
          %s207 = int_to_ptr.vmem [resolvable:$true] %s206
          %209 = dma.hbm_to_vmem [thread:$0]  %s205, 128, %s207, [#allocation13]
        $region28: #{tpu_custom_call.1} parent=11 // pred_fallthru
          _
      $region12: #{tpu_custom_call.1} parent=5 // pred_fallthru
        _
      %p210 = scmp.lt.s32.totalorder %s14, 3
      // Predicated region
      $region29: #{tpu_custom_call.1} parent=5 // pred_check
        %p211 = pneg %p210
      $region30: #{tpu_custom_call.1} parent=5 // pred_check_branch
        %213 = sbr.rel (%p211) target = $region32
      $region31: #{tpu_custom_call.1} parent=5 // pred_region
        _
      $region32: #{tpu_custom_call.1} parent=5 // pred_fallthru
        _
      %p214 = scmp.le.s32.totalorder 1, %s14
      %p215 = scmp.lt.s32.totalorder %s14, 4
      %p216 = pnand %p214, %p215
      %p217 = pneg %p216
      // Predicated region
      $region33: #{tpu_custom_call.1} parent=5 // pred_check
        _
      $region34: #{tpu_custom_call.1} parent=5 // pred_check_branch
        %219 = sbr.rel (%p216) target = $region36
      $region35: #{tpu_custom_call.1} parent=5 // pred_region
        %s220 = ssub.s32 %s14, 1
        // Predicated region
        $region37: #{tpu_custom_call.1} parent=35 // pred_check
          %p221 = pneg %p52
        $region38: #{tpu_custom_call.1} parent=35 // pred_check_branch
          %223 = sbr.rel (%p221) target = $region40
        $region39: #{tpu_custom_call.1} parent=35 // pred_region
          %225 = dma.done [#allocation7], 128
        $region40: #{tpu_custom_call.1} parent=35 // pred_fallthru
          _
        // Predicated region
        $region41: #{tpu_custom_call.1} parent=35 // pred_check
          %p226 = pneg %p73
        $region42: #{tpu_custom_call.1} parent=35 // pred_check_branch
          %228 = sbr.rel (%p226) target = $region44
        $region43: #{tpu_custom_call.1} parent=35 // pred_region
          %230 = dma.done [#allocation10], 2048
        $region44: #{tpu_custom_call.1} parent=35 // pred_fallthru
          _
        // Predicated region
        $region45: #{tpu_custom_call.1} parent=35 // pred_check
          %p231 = pneg %p94
        $region46: #{tpu_custom_call.1} parent=35 // pred_check_branch
          %233 = sbr.rel (%p231) target = $region48
        $region47: #{tpu_custom_call.1} parent=35 // pred_region
          %235 = dma.done [#allocation10], 2048
        $region48: #{tpu_custom_call.1} parent=35 // pred_fallthru
          _
        // Predicated region
        $region49: #{tpu_custom_call.1} parent=35 // pred_check
          %p236 = pneg %p115
        $region50: #{tpu_custom_call.1} parent=35 // pred_check_branch
          %238 = sbr.rel (%p236) target = $region52
        $region51: #{tpu_custom_call.1} parent=35 // pred_region
          %240 = dma.done [#allocation13], 128
        $region52: #{tpu_custom_call.1} parent=35 // pred_fallthru
          _
        %p241 = pneg %p52
        %p242 = pneg %p49
        %p243 = pneg %p73
        %p244 = pneg %p70
        %p245 = pneg %p94
        %p246 = pneg %p91
        %p247 = pneg %p115
        %p248 = pneg %p112
        %p249 = pneg %p141
        %p250 = pneg %p138
        %p251 = scmp.eq.s32.totalorder %s23, 0
        %p252 = scmp.eq.s32.totalorder %s24, 0
        %p253 = pnand %p251, %p252
        %p254 = pneg %p253
        // Predicated region
        $region53: #{tpu_custom_call.1} parent=35 // pred_check
          _
        $region54: #{tpu_custom_call.1} parent=35 // pred_check_branch
          %256 = sbr.rel (%p253) target = $region56
        $region55: #{tpu_custom_call.1} parent=35 // pred_region
          %257 = vst [vmem:[#allocation2] sm:$0x1] 0.0
          %258 = vst [vmem:[#allocation3] sm:$0x1] 0.0
          %259 = vst [vmem:[#allocation4] sm:$0x1] 0.0
          %260 = vst [vmem:[#allocation5] sm:$0x1] 0.0
        $region56: #{tpu_custom_call.1} parent=35 // pred_fallthru
          _
        %v261 = vld [vmem:[#allocation6] sm:$0xff]
        %v262 = vld [vmem:[#allocation12] sm:$0xff]
        %s263 = smul.u32 %s24, 8
        %v264 = vlaneseq
        %v265 = vshrl.u32 %v264, 7
        %v266 = vstv %s263
        %v267 = vadd.s32 %v266, %v265
        %vm268 = vcmp.lt.s32.totalorder %v267, 8
        %v269 = vsel %vm268, 1, 0
        %v270 = vcvt.s32.f32 %v269
        %v271 = vld [vmem:[#allocation9] sm:$0xff]
        %v272 = vld [vmem:[#allocation9 + $0x8] sm:$0xff]
        %v273 = vld [vmem:[#allocation9 + $0x10] sm:$0xff]
        %v274 = vld [vmem:[#allocation9 + $0x18] sm:$0xff]
        %v275 = vld [vmem:[#allocation9 + $0x20] sm:$0xff]
        %v276 = vld [vmem:[#allocation9 + $0x28] sm:$0xff]
        %v277 = vld [vmem:[#allocation9 + $0x30] sm:$0xff]
        %v278 = vld [vmem:[#allocation9 + $0x38] sm:$0xff]
        %v279 = vld [vmem:[#allocation9 + $0x40] sm:$0xff]
        %v280 = vld [vmem:[#allocation9 + $0x48] sm:$0xff]
        %v281 = vld [vmem:[#allocation9 + $0x50] sm:$0xff]
        %v282 = vld [vmem:[#allocation9 + $0x58] sm:$0xff]
        %v283 = vld [vmem:[#allocation9 + $0x60] sm:$0xff]
        %v284 = vld [vmem:[#allocation9 + $0x68] sm:$0xff]
        %v285 = vld [vmem:[#allocation9 + $0x70] sm:$0xff]
        %v286 = vld [vmem:[#allocation9 + $0x78] sm:$0xff]
        %v287 = vperm.slane %v262, 0
        %288 = vmatpush.xpose.msra.mxu0 %v286
        %289 = vmatpush.xpose.msra.mxu0 %v285
        %290 = vmatpush.xpose.msra.mxu0 %v284
        %291 = vmatpush.xpose.msra.mxu0 %v283
        %292 = vmatpush.xpose.msra.mxu0 %v282
        %293 = vmatpush.xpose.msra.mxu0 %v281
        %294 = vmatpush.xpose.msra.mxu0 %v280
        %295 = vmatpush.xpose.msra.mxu0 %v279
        %296 = vmatpush.xpose.msra.mxu0 %v278
        %297 = vmatpush.xpose.msra.mxu0 %v277
        %298 = vmatpush.xpose.msra.mxu0 %v276
        %299 = vmatpush.xpose.msra.mxu0 %v275
        %300 = vmatpush.xpose.msra.mxu0 %v274
        %301 = vmatpush.xpose.msra.mxu0 %v273
        %302 = vmatpush.xpose.msra.mxu0 %v272
        %303 = vmatpush.xpose.msra.mxu0 %v271
        %304 = vmatmul.f32.gmra.mxu0 %v261
        %v305 = vpop.f32.mrf.mxu0
        %v306 = vadd.f32 %v287, %v305
        %307 = vdwg.mxu0
        // Predicated region
        $region57: #{tpu_custom_call.1} parent=35 // pred_check
          %p308 = pneg %p251
        $region58: #{tpu_custom_call.1} parent=35 // pred_check_branch
          %310 = sbr.rel (%p308) target = $region60
        $region59: #{tpu_custom_call.1} parent=35 // pred_region
          %v311 = vmul.f32 %v306, %v270
          %v312 = vld [vmem:[#allocation2] sm:$0x1]
          %v313 = vrot.slane %v311, 4
          %v314 = vadd.f32 %v311, %v313
          %v315 = vrot.slane %v314, 2
          %v316 = vadd.f32 %v314, %v315
          %v317 = vrot.slane %v316, 1
          %v318 = vadd.f32 %v316, %v317
          %v319 = vadd.f32 %v312, %v318
          %320 = vst [vmem:[#allocation2] sm:$0x1] %v319
          %v321 = vld [vmem:[#allocation3] sm:$0x1]
          %v322 = vmul.f32 %v311, %v306
          %v323 = vrot.slane %v322, 4
          %v324 = vadd.f32 %v322, %v323
          %v325 = vrot.slane %v324, 2
          %v326 = vadd.f32 %v324, %v325
          %v327 = vrot.slane %v326, 1
          %v328 = vadd.f32 %v326, %v327
          %v329 = vadd.f32 %v321, %v328
          %330 = vst [vmem:[#allocation3] sm:$0x1] %v329
        $region60: #{tpu_custom_call.1} parent=35 // pred_fallthru
          _
        %p331 = scmp.gt.s32.totalorder %s23, 0
        // Predicated region
        $region61: #{tpu_custom_call.1} parent=35 // pred_check
          %p332 = pneg %p331
        $region62: #{tpu_custom_call.1} parent=35 // pred_check_branch
          %334 = sbr.rel (%p332) target = $region64
        $region63: #{tpu_custom_call.1} parent=35 // pred_region
          %v335 = vld [vmem:[#allocation2] sm:$0x1]
          %v336 = vmul.f32 %v335, 0.125
          %v337 = vld [vmem:[#allocation3] sm:$0x1]
          %v338 = vmul.f32 %v337, 0.125
          %v339 = vmul.f32 %v336, %v336
          %v340 = vsub.f32 %v338, %v339
          %v342 = vperm.slane %v336, 0
          %v344 = vsub.f32 %v306, %v342
          %v345 = vadd.f32 %v340, 1e-05
          %v346 = vrsqrt.pop %v345
          %v347 = vmul.f32 %v346, %v345
          %v348 = vmul.f32 %v347, %v346
          %v349 = vmul.f32 0.5, %v348
          %v350 = vsub.f32 1.5, %v349
          %v351 = vmul.f32 %v346, %v350
          %vm352 = vweird.f32 %v345
          %vm353 = vweird.f32 %v346
          %vm354 = vmor %vm352, %vm353
          %v355 = vsel %vm354, %v346, %v351
          %v357 = vperm.slane %v355, 0
          %v359 = vmul.f32 %v344, %v357
          %v360 = vperm.slane %v262, 1
          %v361 = vmul.f32 %v359, %v360
          %v362 = vperm.slane %v262, 2
          %v363 = vadd.f32 %v361, %v362
          %v364 = vmax.f32 %v363, 0.0
          %v365 = vld [vmem:[#allocation11] sm:$0xff]
          %v366 = vld [vmem:[#allocation11 + $0x8] sm:$0xff]
          %v367 = vld [vmem:[#allocation11 + $0x10] sm:$0xff]
          %v368 = vld [vmem:[#allocation11 + $0x18] sm:$0xff]
          %v369 = vld [vmem:[#allocation11 + $0x20] sm:$0xff]
          %v370 = vld [vmem:[#allocation11 + $0x28] sm:$0xff]
          %v371 = vld [vmem:[#allocation11 + $0x30] sm:$0xff]
          %v372 = vld [vmem:[#allocation11 + $0x38] sm:$0xff]
          %v373 = vld [vmem:[#allocation11 + $0x40] sm:$0xff]
          %v374 = vld [vmem:[#allocation11 + $0x48] sm:$0xff]
          %v375 = vld [vmem:[#allocation11 + $0x50] sm:$0xff]
          %v376 = vld [vmem:[#allocation11 + $0x58] sm:$0xff]
          %v377 = vld [vmem:[#allocation11 + $0x60] sm:$0xff]
          %v378 = vld [vmem:[#allocation11 + $0x68] sm:$0xff]
          %v379 = vld [vmem:[#allocation11 + $0x70] sm:$0xff]
          %v380 = vld [vmem:[#allocation11 + $0x78] sm:$0xff]
          %v381 = vperm.slane %v262, 3
          %382 = vmatpush.xpose.msra.mxu0 %v380
          %383 = vmatpush.xpose.msra.mxu0 %v379
          %384 = vmatpush.xpose.msra.mxu0 %v378
          %385 = vmatpush.xpose.msra.mxu0 %v377
          %386 = vmatpush.xpose.msra.mxu0 %v376
          %387 = vmatpush.xpose.msra.mxu0 %v375
          %388 = vmatpush.xpose.msra.mxu0 %v374
          %389 = vmatpush.xpose.msra.mxu0 %v373
          %390 = vmatpush.xpose.msra.mxu0 %v372
          %391 = vmatpush.xpose.msra.mxu0 %v371
          %392 = vmatpush.xpose.msra.mxu0 %v370
          %393 = vmatpush.xpose.msra.mxu0 %v369
          %394 = vmatpush.xpose.msra.mxu0 %v368
          %395 = vmatpush.xpose.msra.mxu0 %v367
          %396 = vmatpush.xpose.msra.mxu0 %v366
          %397 = vmatpush.xpose.msra.mxu0 %v365
          %398 = vmatmul.f32.gmra.mxu0 %v364
          %v399 = vpop.f32.mrf.mxu0
          %v400 = vadd.f32 %v381, %v399
          %401 = vdwg.mxu0
          %p402 = scmp.eq.s32.totalorder %s23, 1
          // Predicated region
          $region65: #{tpu_custom_call.1} parent=63 // pred_check
            %p403 = pneg %p402
          $region66: #{tpu_custom_call.1} parent=63 // pred_check_branch
            %405 = sbr.rel (%p403) target = $region68
          $region67: #{tpu_custom_call.1} parent=63 // pred_region
            %v406 = vmul.f32 %v400, %v270
            %v407 = vld [vmem:[#allocation4] sm:$0x1]
            %v408 = vrot.slane %v406, 4
            %v409 = vadd.f32 %v406, %v408
            %v410 = vrot.slane %v409, 2
            %v411 = vadd.f32 %v409, %v410
            %v412 = vrot.slane %v411, 1
            %v413 = vadd.f32 %v411, %v412
            %v414 = vadd.f32 %v407, %v413
            %415 = vst [vmem:[#allocation4] sm:$0x1] %v414
            %v416 = vld [vmem:[#allocation5] sm:$0x1]
            %v417 = vmul.f32 %v406, %v400
            %v418 = vrot.slane %v417, 4
            %v419 = vadd.f32 %v417, %v418
            %v420 = vrot.slane %v419, 2
            %v421 = vadd.f32 %v419, %v420
            %v422 = vrot.slane %v421, 1
            %v423 = vadd.f32 %v421, %v422
            %v424 = vadd.f32 %v416, %v423
            %425 = vst [vmem:[#allocation5] sm:$0x1] %v424
          $region68: #{tpu_custom_call.1} parent=63 // pred_fallthru
            _
          %p426 = scmp.eq.s32.totalorder %s23, 2
          // Predicated region
          $region69: #{tpu_custom_call.1} parent=63 // pred_check
            %p427 = pneg %p426
          $region70: #{tpu_custom_call.1} parent=63 // pred_check_branch
            %429 = sbr.rel (%p427) target = $region72
          $region71: #{tpu_custom_call.1} parent=63 // pred_region
            %v430 = vld [vmem:[#allocation4] sm:$0x1]
            %v431 = vmul.f32 %v430, 0.125
            %v432 = vld [vmem:[#allocation5] sm:$0x1]
            %v433 = vmul.f32 %v432, 0.125
            %v434 = vmul.f32 %v431, %v431
            %v435 = vsub.f32 %v433, %v434
            %v437 = vperm.slane %v431, 0
            %v439 = vsub.f32 %v400, %v437
            %v440 = vadd.f32 %v435, 1e-05
            %v441 = vrsqrt.pop %v440
            %v442 = vmul.f32 %v441, %v440
            %v443 = vmul.f32 %v442, %v441
            %v444 = vmul.f32 0.5, %v443
            %v445 = vsub.f32 1.5, %v444
            %v446 = vmul.f32 %v441, %v445
            %vm447 = vweird.f32 %v440
            %vm448 = vweird.f32 %v441
            %vm449 = vmor %vm447, %vm448
            %v450 = vsel %vm449, %v441, %v446
            %v452 = vperm.slane %v450, 0
            %v454 = vmul.f32 %v439, %v452
            %v455 = vperm.slane %v262, 4
            %v456 = vmul.f32 %v454, %v455
            %v457 = vperm.slane %v262, 5
            %v458 = vadd.f32 %v456, %v457
            %v459 = vadd.f32 %v458, %v261
            %v460 = vmax.f32 %v459, 0.0
            %461 = vst [vmem:[#allocation14] sm:$0xff] %v460
          $region72: #{tpu_custom_call.1} parent=63 // pred_fallthru
            _
        $region64: #{tpu_custom_call.1} parent=35 // pred_fallthru
          _
        // Predicated region
        $region73: #{tpu_custom_call.1} parent=35 // pred_check
          %p462 = pneg %p138
        $region74: #{tpu_custom_call.1} parent=35 // pred_check_branch
          %464 = sbr.rel (%p462) target = $region76
        $region75: #{tpu_custom_call.1} parent=35 // pred_region
          %466 = vsyncadd [#allocation8], 0
          %s467 = smul.addr %s24, 8
          %s468 = scalar_lea.hbm %s4, %s467
          %s470 = sshll.u32 [#allocation14], 4
          %s471 = int_to_ptr.vmem [resolvable:$true] %s470
          %s472 = sshll.u32 %s468, 4
          %s473 = int_to_ptr.hbm [resolvable:$true] %s472
          %475 = dma.vmem_to_hbm [thread:$0]  %s471, 128, %s473, [#allocation8]
        $region76: #{tpu_custom_call.1} parent=35 // pred_fallthru
          _
        // Predicated region
        $region77: #{tpu_custom_call.1} parent=35 // pred_check
          %p476 = pneg %p138
        $region78: #{tpu_custom_call.1} parent=35 // pred_check_branch
          %478 = sbr.rel (%p476) target = $region80
        $region79: #{tpu_custom_call.1} parent=35 // pred_region
          %480 = dma.done [#allocation8], 128
        $region80: #{tpu_custom_call.1} parent=35 // pred_fallthru
          _
      $region36: #{tpu_custom_call.1} parent=5 // pred_fallthru
        _
      %p481 = scmp.le.s32.totalorder 2, %s14
      // Predicated region
      $region81: #{tpu_custom_call.1} parent=5 // pred_check
        %p482 = pneg %p481
      $region82: #{tpu_custom_call.1} parent=5 // pred_check_branch
        %484 = sbr.rel (%p482) target = $region84
      $region83: #{tpu_custom_call.1} parent=5 // pred_region
        %s485 = ssub.s32 %s14, 2
      $region84: #{tpu_custom_call.1} parent=5 // pred_fallthru
        _
    $region6: #{tpu_custom_call.1} parent=1 // loop_footer
      %s18 = sadd.s32 1, %s14
    $region7: #{tpu_custom_call.1} parent=1 // loop_footer_branch
      %13 = sbr.rel target = $region3
    $region8: #{tpu_custom_call.1} parent=1 // loop_exit
      _
    %486 = vsyncpa [#allocation7], 1
    %s487 = scalar_lea.sflag [#allocation7], 1
    %488 = vsyncpa %s487, 1
    %489 = vsyncpa [#allocation10], 1
    %490 = vsyncpa [#allocation13], 1
    %491 = vsyncpa [#allocation8], 1
    %s492 = scalar_lea.sflag [#allocation8], 1
    %493 = vsyncpa %s492, 1

</llo_original>
